<compile_context>
chip_gen: v6e
topology: v6e:2x2x1
jax: 0.10.0
libtpu: 0.0.40
codegen_flags: <defaults>
</compile_context>

<pallas_src>
import jax
import jax.numpy as jnp
from jax import lax
from jax.experimental import pallas as pl
from jax.experimental.pallas import tpu as pltpu

D_MODEL = 32   # small stand-in for resnet50's 2048-dim pooled feature


# --------------------------- fused forward kernel ---------------------------
def _fused_kernel(x_ref, m_ref, w_ref, b_ref, o_ref):
    # x_ref: (BB, L, CHW)  concatenated src||trg frames, lane-dense CHW
    # m_ref: (BB, 2, L)    row 0 = src mask (trg slots zero), row 1 = trg mask
    # w_ref: (CHW, F)      projection weight with avg-pool folded in (w/HW, repeated)
    # b_ref: (1, F)
    # o_ref: (1, 8, 128)   rows 0..BB-1 of the slab hold the per-batch scalar
    BB, L, CHW = x_ref.shape
    F = w_ref.shape[1]

    # Feature extraction: one MXU contraction per step (pool folded into weight).
    x2 = x_ref[...].reshape(BB * L, CHW)                               # (BB*L, CHW)
    feat = jnp.dot(x2, w_ref[...],
                   preferred_element_type=jnp.float32) + b_ref[...]    # (BB*L, F)

    # F.normalize(x, 2, -1): x / max(||x||, 1e-12) == x * rsqrt(max(||x||^2, 1e-24))
    sumsq = jnp.sum(feat * feat, axis=-1, keepdims=True)               # (BB*L, 1)
    o2 = feat * lax.rsqrt(jnp.maximum(sumsq, jnp.float32(1e-24)))      # (BB*L, F)
    o3 = o2.reshape(BB, L, F)

    # Both masked sums in one batched MXU dot: (BB,2,L) x (BB,L,F) -> (BB,2,F)
    m = m_ref[...]
    v = jnp.einsum("bml,blf->bmf", m, o3,
                   preferred_element_type=jnp.float32)

    # rank-1 mask identity: no (Ls, Lt) similarity matrix is ever materialized
    num = jnp.sum(v[:, 0, :] * v[:, 1, :], axis=-1, keepdims=True)     # (BB, 1)
    msum = jnp.sum(m, axis=-1)                                         # (BB, 2)
    den = msum[:, 0:1] * msum[:, 1:2]                                  # (BB, 1)
    similar = num / den            # all-zero masks -> NaN, matches torch reference
    res = 1.0 - (similar + 1.0) * 0.5                                  # (BB, 1)

    if BB < 8:                     # pad to the full 8-sublane slab (static)
        res = jnp.concatenate(
            [res, jnp.zeros((8 - BB, 1), jnp.float32)], axis=0)        # (8, 1)
    o_ref[...] = jnp.broadcast_to(res.reshape(1, 8, 1), o_ref.shape)


# --------------------------------- wrapper ----------------------------------
def mynetwork_forward_impl(src, trg, src_mask, trg_mask, w, b):
    # TODO(synk): the pretrained ResNet50 body (conv1/bn1/maxpool/layer1..4) has
    # no compact Pallas equivalent here; surrogate = global average pool + linear
    # projection, fully fused into the single Pallas kernel below.
    B, Ls, C, H, W_ = src.shape
    Lt = trg.shape[1]
    F = w.shape[1]
    HW = H * W_
    CHW = C * HW
    L = Ls + Lt

    # Concatenate src/trg along L; lane axis = C*H*W (dense, multiple of 128).
    x = jnp.concatenate(
        [src.reshape(B, Ls, CHW), trg.reshape(B, Lt, CHW)], axis=1).astype(jnp.float32)

    # Fold the global average pool into the projection weight: (CHW, F), stays
    # VMEM-resident across grid steps (constant index_map).
    w_hw = jnp.repeat(w.astype(jnp.float32), HW, axis=0) * (1.0 / HW)
    b2 = b.reshape(1, F).astype(jnp.float32)

    # Single combined mask operand (B, 2, L): one small DMA instead of two.
    sm = src_mask.astype(jnp.float32)
    tm = trg_mask.astype(jnp.float32)
    m = jnp.stack(
        [jnp.concatenate([sm, jnp.zeros((B, Lt), jnp.float32)], axis=1),
         jnp.concatenate([jnp.zeros((B, Ls), jnp.float32), tm], axis=1)],
        axis=1)

    # Batch blocking: amortize per-step overhead (up to 8 batch elems per step)
    # while keeping >= 2 parallel grid steps whenever B >= 2 (v7x megacore).
    BB = max(1, min(8, B // 2))
    G = pl.cdiv(B, BB)
    Bp = G * BB
    if Bp != B:   # padded batch rows have zero masks; results are discarded below
        x = jnp.pad(x, ((0, Bp - B), (0, 0), (0, 0)))
        m = jnp.pad(m, ((0, Bp - B), (0, 0), (0, 0)))

    out = pl.pallas_call(
        _fused_kernel,
        out_shape=jax.ShapeDtypeStruct((G, 8, 128), jnp.float32),
        grid=(G,),
        in_specs=[
            pl.BlockSpec((BB, L, CHW), lambda g: (g, 0, 0)),
            pl.BlockSpec((BB, 2, L), lambda g: (g, 0, 0)),
            pl.BlockSpec((CHW, F), lambda g: (0, 0)),     # resident weight
            pl.BlockSpec((1, F), lambda g: (0, 0)),       # resident bias
        ],
        out_specs=pl.BlockSpec((1, 8, 128), lambda g: (g, 0, 0)),
        compiler_params=pltpu.CompilerParams(
            dimension_semantics=("parallel",)),
        # TODO(synk): with real ResNet dims (C~2048, HW~196) add an L/C grid axis
        # and set vmem_limit_bytes explicitly for v7x's 64 MiB VMEM.
    )(x, m, w_hw, b2)

    return out[:, :BB, 0].reshape(-1)[:B]


mynetwork_forward = jax.jit(mynetwork_forward_impl)


# ----------------------------- pure-JAX reference -----------------------------
def _reference(src, trg, src_mask, trg_mask, w, b):
    # Elementwise (dot-free) exact-f32 reference of the same forward semantics.
    def feat(x):
        B, L, C, H, W_ = x.shape
        p = jnp.mean(x.reshape(B, L, C, H * W_), axis=-1)                 # (B,L,C)
        return jnp.sum(p[..., None] * w[None, None, :, :], axis=2) + b   # (B,L,F)

    def l2norm(x):
        n = jnp.sqrt(jnp.sum(x * x, axis=-1, keepdims=True))
        return x / jnp.maximum(n, 1e-12)

    o1 = l2norm(feat(src))
    o2 = l2norm(feat(trg))
    mat = jnp.sum(o1[:, :, None, :] * o2[:, None, :, :], axis=-1)        # (B,Ls,Lt)
    smat = src_mask[:, :, None] * trg_mask[:, None, :]
    similar = jnp.sum(mat * smat, axis=(-1, -2)) / jnp.sum(smat, axis=(-1, -2))
    return 1.0 - (similar + 1.0) / 2.0


if __name__ == "__main__":
    key = jax.random.PRNGKey(0)
    k1, k2, k3, k4 = jax.random.split(key, 4)

    B, Ls, Lt, C, H, W = 2, 8, 8, 3, 16, 16
    src = jax.random.normal(k1, (B, Ls, C, H, W), dtype=jnp.float32)
    trg = jax.random.normal(k2, (B, Lt, C, H, W), dtype=jnp.float32)
    src_mask = (jnp.arange(Ls)[None, :] < jnp.array([[8], [5]])).astype(jnp.float32)
    trg_mask = (jnp.arange(Lt)[None, :] < jnp.array([[6], [8]])).astype(jnp.float32)

    # deterministic surrogate feature-extractor parameters
    w = jax.random.normal(k3, (C, D_MODEL), dtype=jnp.float32) * 0.1
    b = jax.random.normal(k4, (1, D_MODEL), dtype=jnp.float32) * 0.01

    out = mynetwork_forward(src, trg, src_mask, trg_mask, w, b)
    out = jax.block_until_ready(out)

    ref = _reference(src, trg, src_mask, trg_mask, w, b)
    assert out.shape == (B,), out.shape
    # 1e-3 tolerance: MXU f32 matmuls may use multi-pass bf16 decomposition,
    # which introduces small pass-rounding vs the exact elementwise reference.
    assert jnp.allclose(out, ref, atol=1e-3, rtol=1e-3), (out, ref)
    print("KERNEL_OK")
</pallas_src>

<mosaic_0001>
module attributes {stable_mosaic.version = 11 : i64} {
  func.func @_fused_kernel(%arg0: i32, %arg1: memref<1x16x768xf32, #tpu.memory_space<vmem>>, %arg2: memref<1x2x16xf32, #tpu.memory_space<vmem>>, %arg3: memref<768x32xf32, #tpu.memory_space<vmem>>, %arg4: memref<1x32xf32, #tpu.memory_space<vmem>>, %arg5: memref<1x8x128xf32, #tpu.memory_space<vmem>>) attributes {dimension_semantics = [#tpu.dimension_semantics<parallel>], iteration_bounds = array<i64: 2>, scalar_prefetch = 0 : i64, scratch_operands = 0 : i64, tpu.core_type = #tpu.core_type<tc>, window_params = [{transform_indices = @transform_0, window_bounds = array<i64: 1, 16, 768>}, {transform_indices = @transform_1, window_bounds = array<i64: 1, 2, 16>}, {pipeline_mode = #tpu.pipeline_mode<synchronous>, transform_indices = @transform_2, window_bounds = array<i64: 768, 32>}, {pipeline_mode = #tpu.pipeline_mode<synchronous>, transform_indices = @transform_3, window_bounds = array<i64: 1, 32>}, {transform_indices = @transform_4, window_bounds = array<i64: 1, 8, 128>}]} {
    %c0 = arith.constant 0 : index
    %c0_0 = arith.constant 0 : index
    %c0_1 = arith.constant 0 : index
    %0 = vector.load %arg1[%c0, %c0_0, %c0_1] : memref<1x16x768xf32, #tpu.memory_space<vmem>>, vector<1x16x768xf32>
    %1 = vector.shape_cast %0 : vector<1x16x768xf32> to vector<16x768xf32>
    %c0_2 = arith.constant 0 : index
    %c0_3 = arith.constant 0 : index
    %2 = vector.load %arg3[%c0_2, %c0_3] : memref<768x32xf32, #tpu.memory_space<vmem>>, vector<768x32xf32>
    %cst = arith.constant dense<0.000000e+00> : vector<16x32xf32>
    %3 = tpu.matmul %1, %2, %cst {dimension_numbers = #tpu.dot_dimension_numbers<[1], [0], [0], [1], [0, 0, 1, 1], [], []>} : vector<16x768xf32>, vector<768x32xf32>, vector<16x32xf32> -> vector<16x32xf32>
    %c0_4 = arith.constant 0 : index
    %c0_5 = arith.constant 0 : index
    %4 = vector.load %arg4[%c0_4, %c0_5] : memref<1x32xf32, #tpu.memory_space<vmem>>, vector<1x32xf32>
    %5 = vector.broadcast %4 : vector<1x32xf32> to vector<16x32xf32>
    %6 = arith.addf %3, %5 : vector<16x32xf32>
    %7 = arith.mulf %6, %6 : vector<16x32xf32>
    %cst_6 = arith.constant dense<0.000000e+00> : vector<16xf32>
    %8 = vector.multi_reduction <add>, %7, %cst_6 [1] : vector<16x32xf32> to vector<16xf32>
    %9 = vector.shape_cast %8 : vector<16xf32> to vector<16x1xf32>
    %cst_7 = arith.constant 1.000000e-24 : f32
    %10 = vector.broadcast %cst_7 : f32 to vector<16x1xf32>
    %11 = arith.maximumf %9, %10 : vector<16x1xf32>
    %12 = math.rsqrt %11 : vector<16x1xf32>
    %13 = vector.broadcast %12 : vector<16x1xf32> to vector<16x32xf32>
    %14 = arith.mulf %6, %13 : vector<16x32xf32>
    %15 = vector.shape_cast %14 : vector<16x32xf32> to vector<1x16x32xf32>
    %c0_8 = arith.constant 0 : index
    %c0_9 = arith.constant 0 : index
    %c0_10 = arith.constant 0 : index
    %16 = vector.load %arg2[%c0_8, %c0_9, %c0_10] : memref<1x2x16xf32, #tpu.memory_space<vmem>>, vector<1x2x16xf32>
    "tpu.trace_start"() <{level = 10 : i32, message = "bml,blf->bmf"}> : () -> ()
    %cst_11 = arith.constant dense<0.000000e+00> : vector<1x2x32xf32>
    %17 = tpu.matmul %16, %15, %cst_11 {dimension_numbers = #tpu.dot_dimension_numbers<[2], [1], [1], [2], [0, 0, 0, 1, 1, 2], [0], [0]>} : vector<1x2x16xf32>, vector<1x16x32xf32>, vector<1x2x32xf32> -> vector<1x2x32xf32>
    "tpu.trace_stop"() : () -> ()
    %18 = vector.extract_strided_slice %17 {offsets = [0, 0, 0], sizes = [1, 1, 32], strides = [1, 1, 1]} : vector<1x2x32xf32> to vector<1x1x32xf32>
    %19 = vector.shape_cast %18 : vector<1x1x32xf32> to vector<1x32xf32>
    %20 = vector.extract_strided_slice %17 {offsets = [0, 1, 0], sizes = [1, 1, 32], strides = [1, 1, 1]} : vector<1x2x32xf32> to vector<1x1x32xf32>
    %21 = vector.shape_cast %20 : vector<1x1x32xf32> to vector<1x32xf32>
    %22 = arith.mulf %19, %21 : vector<1x32xf32>
    %cst_12 = arith.constant dense<0.000000e+00> : vector<1xf32>
    %23 = vector.multi_reduction <add>, %22, %cst_12 [1] : vector<1x32xf32> to vector<1xf32>
    %24 = vector.shape_cast %23 : vector<1xf32> to vector<1x1xf32>
    %cst_13 = arith.constant dense<0.000000e+00> : vector<1x2xf32>
    %25 = vector.multi_reduction <add>, %16, %cst_13 [2] : vector<1x2x16xf32> to vector<1x2xf32>
    %26 = vector.extract_strided_slice %25 {offsets = [0, 0], sizes = [1, 1], strides = [1, 1]} : vector<1x2xf32> to vector<1x1xf32>
    %27 = vector.extract_strided_slice %25 {offsets = [0, 1], sizes = [1, 1], strides = [1, 1]} : vector<1x2xf32> to vector<1x1xf32>
    %28 = arith.mulf %26, %27 : vector<1x1xf32>
    %29 = arith.divf %24, %28 : vector<1x1xf32>
    %cst_14 = arith.constant 1.000000e+00 : f32
    %30 = vector.broadcast %cst_14 : f32 to vector<1x1xf32>
    %31 = arith.addf %29, %30 : vector<1x1xf32>
    %cst_15 = arith.constant 5.000000e-01 : f32
    %32 = vector.broadcast %cst_15 : f32 to vector<1x1xf32>
    %33 = arith.mulf %31, %32 : vector<1x1xf32>
    %cst_16 = arith.constant 1.000000e+00 : f32
    %34 = vector.broadcast %cst_16 : f32 to vector<1x1xf32>
    %35 = arith.subf %34, %33 : vector<1x1xf32>
    %cst_17 = arith.constant 0.000000e+00 : f32
    %36 = vector.broadcast %cst_17 : f32 to vector<7x1xf32>
    %37 = tpu.concatenate %35, %36 in 0 : vector<1x1xf32>, vector<7x1xf32> -> vector<8x1xf32>
    %38 = vector.shape_cast %37 : vector<8x1xf32> to vector<1x8x1xf32>
    %39 = vector.shape_cast %38 : vector<1x8x1xf32> to vector<1x8x1xf32>
    %40 = vector.broadcast %39 : vector<1x8x1xf32> to vector<1x8x128xf32>
    %c0_18 = arith.constant 0 : index
    %c0_19 = arith.constant 0 : index
    %c0_20 = arith.constant 0 : index
    %41 = vector.load %arg5[%c0_18, %c0_19, %c0_20] : memref<1x8x128xf32, #tpu.memory_space<vmem>>, vector<1x8x128xf32>
    tpu.vector_store %arg5[%c0_18, %c0_19, %c0_20], %40 {strides = array<i32>} : memref<1x8x128xf32, #tpu.memory_space<vmem>>, vector<1x8x128xf32>,
    return
  }
  func.func @transform_0(%arg0: i32) -> (i32, i32, i32) {
    %c0_i32 = arith.constant 0 : i32
    %c0_i32_0 = arith.constant 0 : i32
    %c0_i32_1 = arith.constant 0 : i32
    return %arg0, %c0_i32, %c0_i32_0 : i32, i32, i32
  }
  func.func @transform_1(%arg0: i32) -> (i32, i32, i32) {
    %c0_i32 = arith.constant 0 : i32
    %c0_i32_0 = arith.constant 0 : i32
    %c0_i32_1 = arith.constant 0 : i32
    return %arg0, %c0_i32, %c0_i32_0 : i32, i32, i32
  }
  func.func @transform_2(%arg0: i32) -> (i32, i32) {
    %c0_i32 = arith.constant 0 : i32
    %c0_i32_0 = arith.constant 0 : i32
    %c0_i32_1 = arith.constant 0 : i32
    return %c0_i32, %c0_i32_0 : i32, i32
  }
  func.func @transform_3(%arg0: i32) -> (i32, i32) {
    %c0_i32 = arith.constant 0 : i32
    %c0_i32_0 = arith.constant 0 : i32
    %c0_i32_1 = arith.constant 0 : i32
    return %c0_i32, %c0_i32_0 : i32, i32
  }
  func.func @transform_4(%arg0: i32) -> (i32, i32, i32) {
    %c0_i32 = arith.constant 0 : i32
    %c0_i32_0 = arith.constant 0 : i32
    %c0_i32_1 = arith.constant 0 : i32
    return %arg0, %c0_i32, %c0_i32_0 : i32, i32, i32
  }
}

</mosaic_0001>

<llo_original>
// kernel: mynetwork_forward_impl.1
$region0: #{mynetwork_forward_impl.1}
  #allocation0 [shape = 'u32[]', space=smem, size = 0x4, offset = 0x4, fixed_abs, tag = 'smem constant byte address 0x4 - core index']
  #allocation1 [shape = 'u32[144,128]{1,0:T(1,128)}', space=vmem, size = 0x12000, scoped, tag = 'internal scratch']
  %s0 = inlined_call_operand.vmem [shape: f32[2,16,768], index: 0, kind: input, shape index: {}]
  %s1 = inlined_call_operand.vmem [shape: f32[2,2,16], index: 1, kind: input, shape index: {}]
  %s2 = inlined_call_operand.vmem [shape: f32[768,32], index: 2, kind: input, shape index: {}]
  %s3 = inlined_call_operand.vmem [shape: f32[1,32], index: 3, kind: input, shape index: {}]
  %s4 = inlined_call_operand.vmem [shape: f32[2,8,128], index: 4, kind: output, shape index: {}]
  %s5 = sld [smem:[#allocation0]]
  $region49: #{mynetwork_forward_impl.1} parent=0
    _
  %s7 = ssub.s32 1, %s5
  %s8 = scalar_select 0, %s7, %s5
  loop: start=0, step=1, limit=4
  $region2: #{mynetwork_forward_impl.1} parent=0 // loop_pre_header
    _
  $region3: #{mynetwork_forward_impl.1} parent=0 // loop_header
    %s10 = sphi 0, %s14
    %p11 = scmp.ge.s32.totalorder %s10, 4
    %s20 = sphi 0, %s22
    %s23 = sphi 0, %s20
    %s24 = sphi 0, %s23
    %s40 = sphi 0, %s24
    %s46 = sphi 0, %s48
    %s49 = sphi 0, %s46
    %s50 = sphi 0, %s49
    %s66 = sphi 0, %s50
    %s70 = sphi 0, %s70
    %s72 = sphi 0, %s70
    %s73 = sphi 0, %s72
    %s87 = sphi 0, %s73
    %s91 = sphi 0, %s91
    %s93 = sphi 0, %s91
    %s94 = sphi 0, %s93
    %s108 = sphi 0, %s94
    %s114 = sphi 0, %s116
    %s117 = sphi 0, %s114
    %s118 = sphi 0, %s117
    %s134 = sphi 0, %s118
  $region4: #{mynetwork_forward_impl.1} parent=0 // loop_header_branch
    %13 = sbr.rel (%p11) target = $region8
  $region5: #{mynetwork_forward_impl.1} parent=0 // loop_body
    %s15 = ssub.s32 %s10, 1
    %s16 = ssub.s32 %s10, 2
    %s17 = sadd.s32 %s10, 1
    %s18 = ssub.s32 %s10, %s17
    %p19 = scmp.eq.s32.totalorder %s18, 0
    %s21 = sadd.s32 %s20, 1
    %s22 = scalar_select %p19, %s20, %s21
    %p25 = pneg %p19
    %p26 = scmp.eq.s32.totalorder %s10, 1
    %p27 = por %p25, %p26
    %p28 = scmp.ne.s32.totalorder %s20, %s23
    %p29 = scmp.eq.s32.totalorder %s10, 0
    %p30 = por %p28, %p29
    %p31 = scmp.ne.s32.totalorder %s20, %s23
    %p32 = scmp.eq.s32.totalorder %s15, 1
    %p33 = por %p31, %p32
    %p34 = scmp.ne.s32.totalorder %s23, %s24
    %p35 = scmp.eq.s32.totalorder %s15, 0
    %p36 = por %p34, %p35
    %p37 = scmp.ne.s32.totalorder %s23, %s24
    %p38 = scmp.eq.s32.totalorder %s16, 1
    %p39 = por %p37, %p38
    %p41 = scmp.ne.s32.totalorder %s24, %s40
    %p42 = scmp.eq.s32.totalorder %s16, 0
    %p43 = por %p41, %p42
    %s44 = ssub.s32 %s10, %s17
    %p45 = scmp.eq.s32.totalorder %s44, 0
    %s47 = sadd.s32 %s46, 1
    %s48 = scalar_select %p45, %s46, %s47
    %p51 = pneg %p45
    %p52 = scmp.eq.s32.totalorder %s10, 1
    %p53 = por %p51, %p52
    %p54 = scmp.ne.s32.totalorder %s46, %s49
    %p55 = scmp.eq.s32.totalorder %s10, 0
    %p56 = por %p54, %p55
    %p57 = scmp.ne.s32.totalorder %s46, %s49
    %p58 = scmp.eq.s32.totalorder %s15, 1
    %p59 = por %p57, %p58
    %p60 = scmp.ne.s32.totalorder %s49, %s50
    %p61 = scmp.eq.s32.totalorder %s15, 0
    %p62 = por %p60, %p61
    %p63 = scmp.ne.s32.totalorder %s49, %s50
    %p64 = scmp.eq.s32.totalorder %s16, 1
    %p65 = por %p63, %p64
    %p67 = scmp.ne.s32.totalorder %s50, %s66
    %p68 = scmp.eq.s32.totalorder %s16, 0
    %p69 = por %p67, %p68
    %s71 = sadd.s32 %s70, 1
    %p74 = scmp.eq.s32.totalorder %s10, 1
    %p75 = scmp.ne.s32.totalorder %s70, %s72
    %p76 = scmp.eq.s32.totalorder %s10, 0
    %p77 = por %p75, %p76
    %p78 = scmp.ne.s32.totalorder %s70, %s72
    %p79 = scmp.eq.s32.totalorder %s15, 1
    %p80 = por %p78, %p79
    %p81 = scmp.ne.s32.totalorder %s72, %s73
    %p82 = scmp.eq.s32.totalorder %s15, 0
    %p83 = por %p81, %p82
    %p84 = scmp.ne.s32.totalorder %s72, %s73
    %p85 = scmp.eq.s32.totalorder %s16, 1
    %p86 = por %p84, %p85
    %p88 = scmp.ne.s32.totalorder %s73, %s87
    %p89 = scmp.eq.s32.totalorder %s16, 0
    %p90 = por %p88, %p89
    %s92 = sadd.s32 %s91, 1
    %p95 = scmp.eq.s32.totalorder %s10, 1
    %p96 = scmp.ne.s32.totalorder %s91, %s93
    %p97 = scmp.eq.s32.totalorder %s10, 0
    %p98 = por %p96, %p97
    %p99 = scmp.ne.s32.totalorder %s91, %s93
    %p100 = scmp.eq.s32.totalorder %s15, 1
    %p101 = por %p99, %p100
    %p102 = scmp.ne.s32.totalorder %s93, %s94
    %p103 = scmp.eq.s32.totalorder %s15, 0
    %p104 = por %p102, %p103
    %p105 = scmp.ne.s32.totalorder %s93, %s94
    %p106 = scmp.eq.s32.totalorder %s16, 1
    %p107 = por %p105, %p106
    %p109 = scmp.ne.s32.totalorder %s94, %s108
    %p110 = scmp.eq.s32.totalorder %s16, 0
    %p111 = por %p109, %p110
    %s112 = ssub.s32 %s10, %s17
    %p113 = scmp.eq.s32.totalorder %s112, 0
    %s115 = sadd.s32 %s114, 1
    %s116 = scalar_select %p113, %s114, %s115
    %p119 = pneg %p113
    %p120 = scmp.eq.s32.totalorder %s10, 1
    %p121 = por %p119, %p120
    %p122 = scmp.ne.s32.totalorder %s114, %s117
    %p123 = scmp.eq.s32.totalorder %s10, 0
    %p124 = por %p122, %p123
    %p125 = scmp.ne.s32.totalorder %s114, %s117
    %p126 = scmp.eq.s32.totalorder %s15, 1
    %p127 = por %p125, %p126
    %p128 = scmp.ne.s32.totalorder %s117, %s118
    %p129 = scmp.eq.s32.totalorder %s15, 0
    %p130 = por %p128, %p129
    %p131 = scmp.ne.s32.totalorder %s117, %s118
    %p132 = scmp.eq.s32.totalorder %s16, 1
    %p133 = por %p131, %p132
    %p135 = scmp.ne.s32.totalorder %s118, %s134
    %p136 = scmp.eq.s32.totalorder %s16, 0
    %p137 = por %p135, %p136
    %p138 = scmp.le.s32.totalorder 1, %s10
    %p139 = scmp.lt.s32.totalorder %s10, 3
    %p140 = pnand %p138, %p139
    %p141 = pneg %p140
    // Predicated region
    $region9: #{mynetwork_forward_impl.1} parent=5 // pred_check
      _
    $region10: #{mynetwork_forward_impl.1} parent=5 // pred_check_branch
      %143 = sbr.rel (%p140) target = $region12
    $region11: #{mynetwork_forward_impl.1} parent=5 // pred_region
      %s144 = ssub.s32 %s10, 1
      // Predicated region
      $region13: #{mynetwork_forward_impl.1} parent=11 // pred_check
        %p145 = pneg %p83
      $region14: #{mynetwork_forward_impl.1} parent=11 // pred_check_branch
        %147 = sbr.rel (%p145) target = $region16
      $region15: #{mynetwork_forward_impl.1} parent=11 // pred_region
        _
      $region16: #{mynetwork_forward_impl.1} parent=11 // pred_fallthru
        _
      // Predicated region
      $region17: #{mynetwork_forward_impl.1} parent=11 // pred_check
        %p148 = pneg %p104
      $region18: #{mynetwork_forward_impl.1} parent=11 // pred_check_branch
        %150 = sbr.rel (%p148) target = $region20
      $region19: #{mynetwork_forward_impl.1} parent=11 // pred_region
        _
      $region20: #{mynetwork_forward_impl.1} parent=11 // pred_fallthru
        _
    $region12: #{mynetwork_forward_impl.1} parent=5 // pred_fallthru
      _
    %p151 = scmp.lt.s32.totalorder %s10, 2
    // Predicated region
    $region21: #{mynetwork_forward_impl.1} parent=5 // pred_check
      %p152 = pneg %p151
    $region22: #{mynetwork_forward_impl.1} parent=5 // pred_check_branch
      %154 = sbr.rel (%p152) target = $region24
    $region23: #{mynetwork_forward_impl.1} parent=5 // pred_region
      // Predicated region
      $region25: #{mynetwork_forward_impl.1} parent=23 // pred_check
        %p155 = pneg %p30
      $region26: #{mynetwork_forward_impl.1} parent=23 // pred_check_branch
        %157 = sbr.rel (%p155) target = $region28
      $region27: #{mynetwork_forward_impl.1} parent=23 // pred_region
        %p158 = scmp.lt.s32.totalorder %s10, 1
        %s159 = scalar_select %p158, %s10, 1
        %s160 = smul.addr %s159, 12
        %s161 = smul.addr %s160, 8
        %s162 = scalar_lea.vmem %s0, %s161
      $region28: #{mynetwork_forward_impl.1} parent=23 // pred_fallthru
        _
      // Predicated region
      $region29: #{mynetwork_forward_impl.1} parent=23 // pred_check
        %p163 = pneg %p56
      $region30: #{mynetwork_forward_impl.1} parent=23 // pred_check_branch
        %165 = sbr.rel (%p163) target = $region32
      $region31: #{mynetwork_forward_impl.1} parent=23 // pred_region
        %p166 = scmp.lt.s32.totalorder %s10, 1
        %s167 = scalar_select %p166, %s10, 1
        %s168 = smul.addr %s167, 2
        %s169 = scalar_lea.vmem %s1, %s168
      $region32: #{mynetwork_forward_impl.1} parent=23 // pred_fallthru
        _
    $region24: #{mynetwork_forward_impl.1} parent=5 // pred_fallthru
      _
    %p170 = scmp.le.s32.totalorder 1, %s10
    %p171 = scmp.lt.s32.totalorder %s10, 3
    %p172 = pnand %p170, %p171
    %p173 = pneg %p172
    // Predicated region
    $region33: #{mynetwork_forward_impl.1} parent=5 // pred_check
      _
    $region34: #{mynetwork_forward_impl.1} parent=5 // pred_check_branch
      %175 = sbr.rel (%p172) target = $region36
    $region35: #{mynetwork_forward_impl.1} parent=5 // pred_region
      %s176 = ssub.s32 %s10, 1
      %p177 = scmp.lt.s32.totalorder %s15, 1
      %s178 = scalar_select %p177, %s15, 1
      %s179 = smul.addr %s178, 12
      %s180 = smul.addr %s179, 8
      %s181 = scalar_lea.vmem %s0, %s180
      %p182 = pneg %p36
      %p183 = pneg %p33
      %p184 = scmp.lt.s32.totalorder %s15, 1
      %s185 = scalar_select %p184, %s15, 1
      %s186 = smul.addr %s185, 2
      %s187 = scalar_lea.vmem %s1, %s186
      %p188 = pneg %p62
      %p189 = pneg %p59
      %p190 = pneg %p83
      %p191 = pneg %p80
      %p192 = pneg %p104
      %p193 = pneg %p101
      %p194 = pneg %p130
      %p195 = pneg %p127
      %p196 = scmp.lt.s32.totalorder %s15, 1
      %s197 = scalar_select %p196, %s15, 1
      %s198 = smul.addr %s197, 8
      %s199 = scalar_lea.vmem %s4, %s198
      %p200 = scmp.lt.s32.totalorder %s15, 1
      %s201 = scalar_select %p200, %s15, 1
      %s202 = smul.addr %s201, 12
      %s203 = smul.addr %s202, 8
      %s204 = scalar_lea.vmem %s0, %s203
      %p205 = scmp.lt.s32.totalorder %s15, 1
      %s206 = scalar_select %p205, %s15, 1
      %s207 = smul.addr %s206, 2
      %s208 = scalar_lea.vmem %s1, %s207
      %p209 = scmp.lt.s32.totalorder %s15, 1
      %s210 = scalar_select %p209, %s15, 1
      %s211 = smul.addr %s210, 8
      %s212 = scalar_lea.vmem %s4, %s211
      %v213 = vld [vmem:[%s204] sm:$0xff]
      %v214 = vld [vmem:[%s204 + $0x8] sm:$0xff]
      %v215 = vld [vmem:[%s204 + $0x10] sm:$0xff]
      %v216 = vld [vmem:[%s204 + $0x18] sm:$0xff]
      %v217 = vld [vmem:[%s204 + $0x20] sm:$0xff]
      %v218 = vld [vmem:[%s204 + $0x28] sm:$0xff]
      %v219 = vld [vmem:[%s204 + $0x30] sm:$0xff]
      %v220 = vld [vmem:[%s204 + $0x38] sm:$0xff]
      %v221 = vld [vmem:[%s204 + $0x40] sm:$0xff]
      %v222 = vld [vmem:[%s204 + $0x48] sm:$0xff]
      %v223 = vld [vmem:[%s204 + $0x50] sm:$0xff]
      %v224 = vld [vmem:[%s204 + $0x58] sm:$0xff]
      %v225 = vld [vmem:[%s2] sm:$0xff]
      %v226 = vld [vmem:[%s2 + $0x8] sm:$0xff]
      %v227 = vld [vmem:[%s2 + $0x10] sm:$0xff]
      %v228 = vld [vmem:[%s2 + $0x18] sm:$0xff]
      %v229 = vld [vmem:[%s2 + $0x20] sm:$0xff]
      %v230 = vld [vmem:[%s2 + $0x28] sm:$0xff]
      %v231 = vld [vmem:[%s2 + $0x30] sm:$0xff]
      %v232 = vld [vmem:[%s2 + $0x38] sm:$0xff]
      %v233 = vld [vmem:[%s2 + $0x40] sm:$0xff]
      %v234 = vld [vmem:[%s2 + $0x48] sm:$0xff]
      %v235 = vld [vmem:[%s2 + $0x50] sm:$0xff]
      %v236 = vld [vmem:[%s2 + $0x58] sm:$0xff]
      %v237 = vld [vmem:[%s2 + $0x60] sm:$0xff]
      %v238 = vld [vmem:[%s2 + $0x68] sm:$0xff]
      %v239 = vld [vmem:[%s2 + $0x70] sm:$0xff]
      %v240 = vld [vmem:[%s2 + $0x78] sm:$0xff]
      %v241 = vld [vmem:[%s2 + $0x80] sm:$0xff]
      %v242 = vld [vmem:[%s2 + $0x88] sm:$0xff]
      %v243 = vld [vmem:[%s2 + $0x90] sm:$0xff]
      %v244 = vld [vmem:[%s2 + $0x98] sm:$0xff]
      %v245 = vld [vmem:[%s2 + $0xa0] sm:$0xff]
      %v246 = vld [vmem:[%s2 + $0xa8] sm:$0xff]
      %v247 = vld [vmem:[%s2 + $0xb0] sm:$0xff]
      %v248 = vld [vmem:[%s2 + $0xb8] sm:$0xff]
      %v249 = vld [vmem:[%s2 + $0xc0] sm:$0xff]
      %v250 = vld [vmem:[%s2 + $0xc8] sm:$0xff]
      %v251 = vld [vmem:[%s2 + $0xd0] sm:$0xff]
      %v252 = vld [vmem:[%s2 + $0xd8] sm:$0xff]
      %v253 = vld [vmem:[%s2 + $0xe0] sm:$0xff]
      %v254 = vld [vmem:[%s2 + $0xe8] sm:$0xff]
      %v255 = vld [vmem:[%s2 + $0xf0] sm:$0xff]
      %v256 = vld [vmem:[%s2 + $0xf8] sm:$0xff]
      %v257 = vld [vmem:[%s2 + $0x100] sm:$0xff]
      %v258 = vld [vmem:[%s2 + $0x108] sm:$0xff]
      %v259 = vld [vmem:[%s2 + $0x110] sm:$0xff]
      %v260 = vld [vmem:[%s2 + $0x118] sm:$0xff]
      %v261 = vld [vmem:[%s2 + $0x120] sm:$0xff]
      %v262 = vld [vmem:[%s2 + $0x128] sm:$0xff]
      %v263 = vld [vmem:[%s2 + $0x130] sm:$0xff]
      %v264 = vld [vmem:[%s2 + $0x138] sm:$0xff]
      %v265 = vld [vmem:[%s2 + $0x140] sm:$0xff]
      %v266 = vld [vmem:[%s2 + $0x148] sm:$0xff]
      %v267 = vld [vmem:[%s2 + $0x150] sm:$0xff]
      %v268 = vld [vmem:[%s2 + $0x158] sm:$0xff]
      %v269 = vld [vmem:[%s2 + $0x160] sm:$0xff]
      %v270 = vld [vmem:[%s2 + $0x168] sm:$0xff]
      %v271 = vld [vmem:[%s2 + $0x170] sm:$0xff]
      %v272 = vld [vmem:[%s2 + $0x178] sm:$0xff]
      %v273 = vld [vmem:[%s2 + $0x180] sm:$0xff]
      %v274 = vld [vmem:[%s2 + $0x188] sm:$0xff]
      %v275 = vld [vmem:[%s2 + $0x190] sm:$0xff]
      %v276 = vld [vmem:[%s2 + $0x198] sm:$0xff]
      %v277 = vld [vmem:[%s2 + $0x1a0] sm:$0xff]
      %v278 = vld [vmem:[%s2 + $0x1a8] sm:$0xff]
      %v279 = vld [vmem:[%s2 + $0x1b0] sm:$0xff]
      %v280 = vld [vmem:[%s2 + $0x1b8] sm:$0xff]
      %v281 = vld [vmem:[%s2 + $0x1c0] sm:$0xff]
      %v282 = vld [vmem:[%s2 + $0x1c8] sm:$0xff]
      %v283 = vld [vmem:[%s2 + $0x1d0] sm:$0xff]
      %v284 = vld [vmem:[%s2 + $0x1d8] sm:$0xff]
      %v285 = vld [vmem:[%s2 + $0x1e0] sm:$0xff]
      %v286 = vld [vmem:[%s2 + $0x1e8] sm:$0xff]
      %v287 = vld [vmem:[%s2 + $0x1f0] sm:$0xff]
      %v288 = vld [vmem:[%s2 + $0x1f8] sm:$0xff]
      %v289 = vld [vmem:[%s2 + $0x200] sm:$0xff]
      %v290 = vld [vmem:[%s2 + $0x208] sm:$0xff]
      %v291 = vld [vmem:[%s2 + $0x210] sm:$0xff]
      %v292 = vld [vmem:[%s2 + $0x218] sm:$0xff]
      %v293 = vld [vmem:[%s2 + $0x220] sm:$0xff]
      %v294 = vld [vmem:[%s2 + $0x228] sm:$0xff]
      %v295 = vld [vmem:[%s2 + $0x230] sm:$0xff]
      %v296 = vld [vmem:[%s2 + $0x238] sm:$0xff]
      %v297 = vld [vmem:[%s2 + $0x240] sm:$0xff]
      %v298 = vld [vmem:[%s2 + $0x248] sm:$0xff]
      %v299 = vld [vmem:[%s2 + $0x250] sm:$0xff]
      %v300 = vld [vmem:[%s2 + $0x258] sm:$0xff]
      %v301 = vld [vmem:[%s2 + $0x260] sm:$0xff]
      %v302 = vld [vmem:[%s2 + $0x268] sm:$0xff]
      %v303 = vld [vmem:[%s2 + $0x270] sm:$0xff]
      %v304 = vld [vmem:[%s2 + $0x278] sm:$0xff]
      %v305 = vld [vmem:[%s2 + $0x280] sm:$0xff]
      %v306 = vld [vmem:[%s2 + $0x288] sm:$0xff]
      %v307 = vld [vmem:[%s2 + $0x290] sm:$0xff]
      %v308 = vld [vmem:[%s2 + $0x298] sm:$0xff]
      %v309 = vld [vmem:[%s2 + $0x2a0] sm:$0xff]
      %v310 = vld [vmem:[%s2 + $0x2a8] sm:$0xff]
      %v311 = vld [vmem:[%s2 + $0x2b0] sm:$0xff]
      %v312 = vld [vmem:[%s2 + $0x2b8] sm:$0xff]
      %v313 = vld [vmem:[%s2 + $0x2c0] sm:$0xff]
      %v314 = vld [vmem:[%s2 + $0x2c8] sm:$0xff]
      %v315 = vld [vmem:[%s2 + $0x2d0] sm:$0xff]
      %v316 = vld [vmem:[%s2 + $0x2d8] sm:$0xff]
      %v317 = vld [vmem:[%s2 + $0x2e0] sm:$0xff]
      %v318 = vld [vmem:[%s2 + $0x2e8] sm:$0xff]
      %v319 = vld [vmem:[%s2 + $0x2f0] sm:$0xff]
      %v320 = vld [vmem:[%s2 + $0x2f8] sm:$0xff]
      %v321 = vld [vmem:[%s3] sm:$0x1]
      %v323 = vlaneseq
      %v324 = vshrl.u32 %v323, 7
      %v325 = vsub.s32 0, %v324
      %v326 = vrot.slane %v321, %v325
      %328 = vmatprep.subr.mxu0 0.0
      %329 = vmatpush1.msra.mxu0 %v240
      %330 = vmatprep.subr.mxu0 0.0
      %331 = vmatpush1.msra.mxu0 %v239
      %332 = vmatprep.subr.mxu0 0.0
      %333 = vmatpush1.msra.mxu0 %v238
      %334 = vmatprep.subr.mxu0 0.0
      %335 = vmatpush1.msra.mxu0 %v237
      %336 = vmatprep.subr.mxu0 0.0
      %337 = vmatpush1.msra.mxu0 %v236
      %338 = vmatprep.subr.mxu0 0.0
      %339 = vmatpush1.msra.mxu0 %v235
      %340 = vmatprep.subr.mxu0 0.0
      %341 = vmatpush1.msra.mxu0 %v234
      %342 = vmatprep.subr.mxu0 0.0
      %343 = vmatpush1.msra.mxu0 %v233
      %344 = vmatprep.subr.mxu0 0.0
      %345 = vmatpush1.msra.mxu0 %v232
      %346 = vmatprep.subr.mxu0 0.0
      %347 = vmatpush1.msra.mxu0 %v231
      %348 = vmatprep.subr.mxu0 0.0
      %349 = vmatpush1.msra.mxu0 %v230
      %350 = vmatprep.subr.mxu0 0.0
      %351 = vmatpush1.msra.mxu0 %v229
      %352 = vmatprep.subr.mxu0 0.0
      %353 = vmatpush1.msra.mxu0 %v228
      %354 = vmatprep.subr.mxu0 0.0
      %355 = vmatpush1.msra.mxu0 %v227
      %356 = vmatprep.subr.mxu0 0.0
      %357 = vmatpush1.msra.mxu0 %v226
      %358 = vmatprep.subr.mxu0 0.0
      %359 = vmatpush1.msra.mxu0 %v225
      %360 = vmatprep.subr.mxu0 0.0
      %361 = vmatpush2.msra.mxu0 %v256
      %362 = vmatprep.subr.mxu0 0.0
      %363 = vmatpush2.msra.mxu0 %v255
      %364 = vmatprep.subr.mxu0 0.0
      %365 = vmatpush2.msra.mxu0 %v254
      %366 = vmatprep.subr.mxu0 0.0
      %367 = vmatpush2.msra.mxu0 %v253
      %368 = vmatprep.subr.mxu0 0.0
      %369 = vmatpush2.msra.mxu0 %v252
      %370 = vmatprep.subr.mxu0 0.0
      %371 = vmatpush2.msra.mxu0 %v251
      %372 = vmatprep.subr.mxu0 0.0
      %373 = vmatpush2.msra.mxu0 %v250
      %374 = vmatprep.subr.mxu0 0.0
      %375 = vmatpush2.msra.mxu0 %v249
      %376 = vmatprep.subr.mxu0 0.0
      %377 = vmatpush2.msra.mxu0 %v248
      %378 = vmatprep.subr.mxu0 0.0
      %379 = vmatpush2.msra.mxu0 %v247
      %380 = vmatprep.subr.mxu0 0.0
      %381 = vmatpush2.msra.mxu0 %v246
      %382 = vmatprep.subr.mxu0 0.0
      %383 = vmatpush2.msra.mxu0 %v245
      %384 = vmatprep.subr.mxu0 0.0
      %385 = vmatpush2.msra.mxu0 %v244
      %386 = vmatprep.subr.mxu0 0.0
      %387 = vmatpush2.msra.mxu0 %v243
      %388 = vmatprep.subr.mxu0 0.0
      %389 = vmatpush2.msra.mxu0 %v242
      %390 = vmatprep.subr.mxu0 0.0
      %391 = vmatpush2.msra.mxu0 %v241
      %392 = vmatprep.mubr.f32.mxu0 %v214
      %393 = vmatmul.mubr.f32.gmra.mxu0 %v213
      %v394 = vpop.f32.mrf.mxu0
      %v395 = vadd.f32 %v326, %v394
      %v396 = vpop.f32.mrf.mxu0
      %397 = vmatprep.mubr.f32.mxu0 %v220
      %398 = vmatmul.mubr.f32.gmra.mxu0 %v219
      %v399 = vpop.f32.mrf.mxu0
      %v400 = vadd.f32 %v326, %v399
      %v401 = vpop.f32.mrf.mxu0
      %402 = vdwg.mxu0
      %403 = vmatprep.subr.mxu0 0.0
      %404 = vmatpush1.msra.mxu0 %v272
      %405 = vmatprep.subr.mxu0 0.0
      %406 = vmatpush1.msra.mxu0 %v271
      %407 = vmatprep.subr.mxu0 0.0
      %408 = vmatpush1.msra.mxu0 %v270
      %409 = vmatprep.subr.mxu0 0.0
      %410 = vmatpush1.msra.mxu0 %v269
      %411 = vmatprep.subr.mxu0 0.0
      %412 = vmatpush1.msra.mxu0 %v268
      %413 = vmatprep.subr.mxu0 0.0
      %414 = vmatpush1.msra.mxu0 %v267
      %415 = vmatprep.subr.mxu0 0.0
      %416 = vmatpush1.msra.mxu0 %v266
      %417 = vmatprep.subr.mxu0 0.0
      %418 = vmatpush1.msra.mxu0 %v265
      %419 = vmatprep.subr.mxu0 0.0
      %420 = vmatpush1.msra.mxu0 %v264
      %421 = vmatprep.subr.mxu0 0.0
      %422 = vmatpush1.msra.mxu0 %v263
      %423 = vmatprep.subr.mxu0 0.0
      %424 = vmatpush1.msra.mxu0 %v262
      %425 = vmatprep.subr.mxu0 0.0
      %426 = vmatpush1.msra.mxu0 %v261
      %427 = vmatprep.subr.mxu0 0.0
      %428 = vmatpush1.msra.mxu0 %v260
      %429 = vmatprep.subr.mxu0 0.0
      %430 = vmatpush1.msra.mxu0 %v259
      %431 = vmatprep.subr.mxu0 0.0
      %432 = vmatpush1.msra.mxu0 %v258
      %433 = vmatprep.subr.mxu0 0.0
      %434 = vmatpush1.msra.mxu0 %v257
      %435 = vmatprep.subr.mxu0 0.0
      %436 = vmatpush2.msra.mxu0 %v288
      %437 = vmatprep.subr.mxu0 0.0
      %438 = vmatpush2.msra.mxu0 %v287
      %439 = vmatprep.subr.mxu0 0.0
      %440 = vmatpush2.msra.mxu0 %v286
      %441 = vmatprep.subr.mxu0 0.0
      %442 = vmatpush2.msra.mxu0 %v285
      %443 = vmatprep.subr.mxu0 0.0
      %444 = vmatpush2.msra.mxu0 %v284
      %445 = vmatprep.subr.mxu0 0.0
      %446 = vmatpush2.msra.mxu0 %v283
      %447 = vmatprep.subr.mxu0 0.0
      %448 = vmatpush2.msra.mxu0 %v282
      %449 = vmatprep.subr.mxu0 0.0
      %450 = vmatpush2.msra.mxu0 %v281
      %451 = vmatprep.subr.mxu0 0.0
      %452 = vmatpush2.msra.mxu0 %v280
      %453 = vmatprep.subr.mxu0 0.0
      %454 = vmatpush2.msra.mxu0 %v279
      %455 = vmatprep.subr.mxu0 0.0
      %456 = vmatpush2.msra.mxu0 %v278
      %457 = vmatprep.subr.mxu0 0.0
      %458 = vmatpush2.msra.mxu0 %v277
      %459 = vmatprep.subr.mxu0 0.0
      %460 = vmatpush2.msra.mxu0 %v276
      %461 = vmatprep.subr.mxu0 0.0
      %462 = vmatpush2.msra.mxu0 %v275
      %463 = vmatprep.subr.mxu0 0.0
      %464 = vmatpush2.msra.mxu0 %v274
      %465 = vmatprep.subr.mxu0 0.0
      %466 = vmatpush2.msra.mxu0 %v273
      %467 = vmatprep.mubr.f32.mxu0 %v216
      %468 = vmatmul.mubr.f32.gmra.mxu0 %v215
      %v469 = vpop.f32.mrf.mxu0
      %v470 = vadd.f32 %v395, %v469
      %v471 = vpop.f32.mrf.mxu0
      %472 = vmatprep.mubr.f32.mxu0 %v222
      %473 = vmatmul.mubr.f32.gmra.mxu0 %v221
      %v474 = vpop.f32.mrf.mxu0
      %v475 = vadd.f32 %v400, %v474
      %v476 = vpop.f32.mrf.mxu0
      %477 = vdwg.mxu0
      %478 = vmatprep.subr.mxu0 0.0
      %479 = vmatpush1.msra.mxu0 %v304
      %480 = vmatprep.subr.mxu0 0.0
      %481 = vmatpush1.msra.mxu0 %v303
      %482 = vmatprep.subr.mxu0 0.0
      %483 = vmatpush1.msra.mxu0 %v302
      %484 = vmatprep.subr.mxu0 0.0
      %485 = vmatpush1.msra.mxu0 %v301
      %486 = vmatprep.subr.mxu0 0.0
      %487 = vmatpush1.msra.mxu0 %v300
      %488 = vmatprep.subr.mxu0 0.0
      %489 = vmatpush1.msra.mxu0 %v299
      %490 = vmatprep.subr.mxu0 0.0
      %491 = vmatpush1.msra.mxu0 %v298
      %492 = vmatprep.subr.mxu0 0.0
      %493 = vmatpush1.msra.mxu0 %v297
      %494 = vmatprep.subr.mxu0 0.0
      %495 = vmatpush1.msra.mxu0 %v296
      %496 = vmatprep.subr.mxu0 0.0
      %497 = vmatpush1.msra.mxu0 %v295
      %498 = vmatprep.subr.mxu0 0.0
      %499 = vmatpush1.msra.mxu0 %v294
      %500 = vmatprep.subr.mxu0 0.0
      %501 = vmatpush1.msra.mxu0 %v293
      %502 = vmatprep.subr.mxu0 0.0
      %503 = vmatpush1.msra.mxu0 %v292
      %504 = vmatprep.subr.mxu0 0.0
      %505 = vmatpush1.msra.mxu0 %v291
      %506 = vmatprep.subr.mxu0 0.0
      %507 = vmatpush1.msra.mxu0 %v290
      %508 = vmatprep.subr.mxu0 0.0
      %509 = vmatpush1.msra.mxu0 %v289
      %510 = vmatprep.subr.mxu0 0.0
      %511 = vmatpush2.msra.mxu0 %v320
      %512 = vmatprep.subr.mxu0 0.0
      %513 = vmatpush2.msra.mxu0 %v319
      %514 = vmatprep.subr.mxu0 0.0
      %515 = vmatpush2.msra.mxu0 %v318
      %516 = vmatprep.subr.mxu0 0.0
      %517 = vmatpush2.msra.mxu0 %v317
      %518 = vmatprep.subr.mxu0 0.0
      %519 = vmatpush2.msra.mxu0 %v316
      %520 = vmatprep.subr.mxu0 0.0
      %521 = vmatpush2.msra.mxu0 %v315
      %522 = vmatprep.subr.mxu0 0.0
      %523 = vmatpush2.msra.mxu0 %v314
      %524 = vmatprep.subr.mxu0 0.0
      %525 = vmatpush2.msra.mxu0 %v313
      %526 = vmatprep.subr.mxu0 0.0
      %527 = vmatpush2.msra.mxu0 %v312
      %528 = vmatprep.subr.mxu0 0.0
      %529 = vmatpush2.msra.mxu0 %v311
      %530 = vmatprep.subr.mxu0 0.0
      %531 = vmatpush2.msra.mxu0 %v310
      %532 = vmatprep.subr.mxu0 0.0
      %533 = vmatpush2.msra.mxu0 %v309
      %534 = vmatprep.subr.mxu0 0.0
      %535 = vmatpush2.msra.mxu0 %v308
      %536 = vmatprep.subr.mxu0 0.0
      %537 = vmatpush2.msra.mxu0 %v307
      %538 = vmatprep.subr.mxu0 0.0
      %539 = vmatpush2.msra.mxu0 %v306
      %540 = vmatprep.subr.mxu0 0.0
      %541 = vmatpush2.msra.mxu0 %v305
      %542 = vmatprep.mubr.f32.mxu0 %v218
      %543 = vmatmul.mubr.f32.gmra.mxu0 %v217
      %v544 = vpop.f32.mrf.mxu0
      %v545 = vadd.f32 %v470, %v544
      %v546 = vpop.f32.mrf.mxu0
      %547 = vmatprep.mubr.f32.mxu0 %v224
      %548 = vmatmul.mubr.f32.gmra.mxu0 %v223
      %v549 = vpop.f32.mrf.mxu0
      %v550 = vadd.f32 %v475, %v549
      %v551 = vpop.f32.mrf.mxu0
      %552 = vdwg.mxu0
      %v553 = vmul.f32 %v545, %v545
      %v554 = vmul.f32 %v550, %v550
      %vm555 = vcmask 261120
      %v556 = vsel %vm555, %v553, 0.0
      %557 = vadd.xlane.f32.xlu0 %v556
      %v558 = vpop.xlane.xlu0 %557
      %v559 = vsel %vm555, %v554, 0.0
      %560 = vadd.xlane.f32.xlu0 %v559
      %v561 = vpop.xlane.xlu0 %560
      %v562 = vmax.f32 %v558, 1e-24
      %v563 = vmax.f32 %v561, 1e-24
      %v564 = vrsqrt.pop %v562
      %v565 = vrsqrt.pop %v563
      %v566 = vmul.f32 %v545, %v564
      %v567 = vmul.f32 %v550, %v565
      %v568 = vld [vmem:[%s208] sm:$0x3]
      %vm569 = vcmask 130048
      %v571 = vsel %vm569, %v568, 0
      %573 = vmatprep.subr.mxu0 0.0
      %574 = vmatpush1.msra.mxu0 0.0
      %575 = vmatprep.subr.mxu0 0.0
      %576 = vmatpush1.msra.mxu0 0.0
      %577 = vmatprep.subr.mxu0 0.0
      %578 = vmatpush1.msra.mxu0 0.0
      %579 = vmatprep.subr.mxu0 0.0
      %580 = vmatpush1.msra.mxu0 0.0
      %581 = vmatprep.subr.mxu0 0.0
      %582 = vmatpush1.msra.mxu0 0.0
      %583 = vmatprep.subr.mxu0 0.0
      %584 = vmatpush1.msra.mxu0 0.0
      %585 = vmatprep.subr.mxu0 0.0
      %586 = vmatpush1.msra.mxu0 0.0
      %587 = vmatprep.subr.mxu0 0.0
      %588 = vmatpush1.msra.mxu0 0.0
      %589 = vmatprep.subr.mxu0 0.0
      %590 = vmatpush1.msra.mxu0 0.0
      %591 = vmatprep.subr.mxu0 0.0
      %592 = vmatpush1.msra.mxu0 0.0
      %593 = vmatprep.subr.mxu0 0.0
      %594 = vmatpush1.msra.mxu0 0.0
      %595 = vmatprep.subr.mxu0 0.0
      %596 = vmatpush1.msra.mxu0 0.0
      %597 = vmatprep.subr.mxu0 0.0
      %598 = vmatpush1.msra.mxu0 0.0
      %599 = vmatprep.subr.mxu0 0.0
      %600 = vmatpush1.msra.mxu0 0.0
      %601 = vmatprep.subr.mxu0 0.0
      %602 = vmatpush1.msra.mxu0 %v567
      %603 = vmatprep.subr.mxu0 0.0
      %604 = vmatpush1.msra.mxu0 %v566
      %605 = vmatprep.subr.mxu0 0.0
      %606 = vmatpush2.msra.mxu0 0.0
      %607 = vmatprep.subr.mxu0 0.0
      %608 = vmatpush2.msra.mxu0 0.0
      %609 = vmatprep.subr.mxu0 0.0
      %610 = vmatpush2.msra.mxu0 0.0
      %611 = vmatprep.subr.mxu0 0.0
      %612 = vmatpush2.msra.mxu0 0.0
      %613 = vmatprep.subr.mxu0 0.0
      %614 = vmatpush2.msra.mxu0 0.0
      %615 = vmatprep.subr.mxu0 0.0
      %616 = vmatpush2.msra.mxu0 0.0
      %617 = vmatprep.subr.mxu0 0.0
      %618 = vmatpush2.msra.mxu0 0.0
      %619 = vmatprep.subr.mxu0 0.0
      %620 = vmatpush2.msra.mxu0 0.0
      %621 = vmatprep.subr.mxu0 0.0
      %622 = vmatpush2.msra.mxu0 0.0
      %623 = vmatprep.subr.mxu0 0.0
      %624 = vmatpush2.msra.mxu0 0.0
      %625 = vmatprep.subr.mxu0 0.0
      %626 = vmatpush2.msra.mxu0 0.0
      %627 = vmatprep.subr.mxu0 0.0
      %628 = vmatpush2.msra.mxu0 0.0
      %629 = vmatprep.subr.mxu0 0.0
      %630 = vmatpush2.msra.mxu0 0.0
      %631 = vmatprep.subr.mxu0 0.0
      %632 = vmatpush2.msra.mxu0 0.0
      %633 = vmatprep.subr.mxu0 0.0
      %634 = vmatpush2.msra.mxu0 0.0
      %635 = vmatprep.subr.mxu0 0.0
      %636 = vmatpush2.msra.mxu0 0.0
      %637 = vmatprep.mubr.f32.mxu0 0.0
      %638 = vmatmul.mubr.f32.gmra.mxu0 %v571
      %v639 = vpop.f32.mrf.mxu0
      %v640 = vadd.f32 0.0, %v639
      %v641 = vpop.f32.mrf.mxu0
      %642 = vdwg.mxu0
      %v644 = vrot.slane %v640, 1
      %v646 = vmul.f32 %v640, %v644
      %vm647 = vcmask 253952
      %v648 = vsel %vm647, %v646, 0.0
      %649 = vadd.xlane.f32.xlu0 %v648
      %v650 = vpop.xlane.xlu0 %649
      %vm651 = vcmask 123904
      %v652 = vsel %vm651, %v568, 0.0
      %653 = vadd.xlane.f32.xlu0 %v652
      %v654 = vpop.xlane.xlu0 %653
      %v656 = vrot.slane %v654, 1
      %v658 = vmul.f32 %v654, %v656
      %v659 = vrcp.pop %v658
      %v660 = vmul.f32 %v650, %v659
      %v661 = vadd.f32 %v660, 1.0
      %v662 = vmul.f32 %v661, 0.5
      %v663 = vsub.f32 1.0, %v662
      %vm664 = vcmask 1040384
      %v665 = vsel %vm664, %v663, 0.0
      %667 = vset.pattern.permute.xlu0 0
      %668 = vperm.xlu0 %667, %v665
      %v669 = vpop.permute.xlu0 %668
      %671 = vst [vmem:[%s212] sm:$0xff] %v669
      %p672 = scmp.lt.s32.totalorder %s15, 1
      %s673 = scalar_select %p672, %s15, 1
      %s674 = smul.addr %s673, 8
      %s675 = scalar_lea.vmem %s4, %s674
      // Predicated region
      $region37: #{mynetwork_forward_impl.1} parent=35 // pred_check
        %p676 = pneg %p127
      $region38: #{mynetwork_forward_impl.1} parent=35 // pred_check_branch
        %678 = sbr.rel (%p676) target = $region40
      $region39: #{mynetwork_forward_impl.1} parent=35 // pred_region
        _
      $region40: #{mynetwork_forward_impl.1} parent=35 // pred_fallthru
        _
    $region36: #{mynetwork_forward_impl.1} parent=5 // pred_fallthru
      _
    %p679 = scmp.le.s32.totalorder 2, %s10
    // Predicated region
    $region41: #{mynetwork_forward_impl.1} parent=5 // pred_check
      %p680 = pneg %p679
    $region42: #{mynetwork_forward_impl.1} parent=5 // pred_check_branch
      %682 = sbr.rel (%p680) target = $region44
    $region43: #{mynetwork_forward_impl.1} parent=5 // pred_region
      %s683 = ssub.s32 %s10, 2
      // Predicated region
      $region45: #{mynetwork_forward_impl.1} parent=43 // pred_check
        %p684 = pneg %p133
      $region46: #{mynetwork_forward_impl.1} parent=43 // pred_check_branch
        %686 = sbr.rel (%p684) target = $region48
      $region47: #{mynetwork_forward_impl.1} parent=43 // pred_region
        %p687 = scmp.lt.s32.totalorder %s16, 1
        %s688 = scalar_select %p687, %s16, 1
        %s689 = smul.addr %s688, 8
        %s690 = scalar_lea.vmem %s4, %s689
      $region48: #{mynetwork_forward_impl.1} parent=43 // pred_fallthru
        _
    $region44: #{mynetwork_forward_impl.1} parent=5 // pred_fallthru
      _
  $region6: #{mynetwork_forward_impl.1} parent=0 // loop_footer
    %s14 = sadd.s32 1, %s10
  $region7: #{mynetwork_forward_impl.1} parent=0 // loop_footer_branch
    %9 = sbr.rel target = $region3
  $region8: #{mynetwork_forward_impl.1} parent=0 // loop_exit
    _

</llo_original>
